<compile_context>
chip_gen: v5e
topology: v5e:2x2
jax: 0.10.0
libtpu: 0.0.40
codegen_flags: <defaults>
</compile_context>

<pallas_src>
import functools

import jax
import jax.numpy as jnp
from jax.experimental import pallas as pl
from jax.experimental.pallas import tpu as pltpu


def _round_up(n, m):
    return ((n + m - 1) // m) * m


def _vmem_budget():
    """Return (vmem_limit_bytes, target_tile_bytes) tuned per TPU generation."""
    cap = None
    try:
        cap = getattr(pltpu.get_tpu_info(), "vmem_capacity_bytes", None)
    except Exception:
        cap = None
    if cap is None or cap < 100 * 1024 * 1024:
        # v7x-class (64 MiB VMEM/TC) or unknown: leave headroom for Mosaic internal
        # scratch, the 2x double-buffered input and in-kernel f32 reduce temporaries.
        return 48 * 1024 * 1024, 6 * 1024 * 1024
    # v5e / v6e (128 MiB VMEM): bigger tiles amortize the ~0.35 us per-step overhead
    # and give long contiguous per-(b, c) DMA rows.
    return 96 * 1024 * 1024, 16 * 1024 * 1024


def _choose_batch_tile(B):
    """Batch tile TB with B % TB == 0.

    Give the "parallel" batch axis >= 2 blocks (for v7x's 2 TensorCores) whenever the
    (TB, C) output block keeps a sublane-friendly (multiple-of-8) leading dim;
    otherwise keep the whole batch in one block (neutral on single-TC v5e/v6e).
    """
    if B >= 16 and B % 8 == 0:
        half = B // 2
        if half % 8 == 0:
            return half          # exactly 2 blocks
        return 8                 # several blocks of 8
    return B


# ----------------------------------------------------------------------------
# Small fast path: whole (B, C, HW) activation fits comfortably in VMEM.
# ----------------------------------------------------------------------------
def _ca_small_kernel(x_ref, w1_ref, w2_ref, o_ref):
    # x_ref: (B, C, HW), w1_ref: (C, Ch), w2_ref: (Ch, C), o_ref: (B, C)
    x = x_ref[...]
    b = x.shape[0]
    hw = x.shape[-1]

    avg = jnp.sum(x, axis=-1, dtype=jnp.float32) * (1.0 / hw)   # (B, C), f32 accum
    mx = jnp.max(x, axis=-1).astype(jnp.float32)                # max exact in-dtype

    w1 = w1_ref[...].astype(jnp.float32)
    w2 = w2_ref[...].astype(jnp.float32)

    stacked = jnp.concatenate([avg, mx], axis=0)                 # (2B, C): one MLP pass
    h = jnp.maximum(jnp.dot(stacked, w1, preferred_element_type=jnp.float32), 0.0)
    s = jax.nn.sigmoid(jnp.dot(h, w2, preferred_element_type=jnp.float32))
    o_ref[...] = (s[:b] + s[b:]).astype(o_ref.dtype)


# ----------------------------------------------------------------------------
# Streamed path: grid = (B tiles, HW tiles), running sum/max in VMEM scratch,
# ragged-tail mask only on the last HW step, MLP + store only in the finalize.
# ----------------------------------------------------------------------------
def _ca_tiled_kernel(x_ref, w1_ref, w2_ref, o_ref, sum_ref, max_ref,
                     *, hw_total, tile_hw, inv_hw):
    k = pl.program_id(1)
    nk = pl.num_programs(1)

    @pl.when(k == 0)
    def _init():
        sum_ref[...] = jnp.zeros_like(sum_ref)
        max_ref[...] = jnp.full_like(max_ref, -jnp.inf)

    def _accumulate(mask_tail):
        x = x_ref[...]                                           # input dtype (bf16/f32)
        if mask_tail:
            lane = jax.lax.broadcasted_iota(jnp.int32, x.shape, dimension=2)
            valid = (k * tile_hw + lane) < hw_total
            x_sum = jnp.where(valid, x, jnp.zeros_like(x))
            x_max = jnp.where(valid, x, jnp.full_like(x, -jnp.inf))
        else:
            x_sum = x
            x_max = x
        # f32-accumulating sum (no full-tile f32 temporary); max is exact in-dtype.
        sum_ref[...] += jnp.sum(x_sum, axis=-1, dtype=jnp.float32)
        max_ref[...] = jnp.maximum(max_ref[...],
                                   jnp.max(x_max, axis=-1).astype(jnp.float32))

    if hw_total % tile_hw != 0:
        # Only the LAST HW step pays the ragged-tail mask; the hot loop stays lean.
        @pl.when(k < nk - 1)
        def _body():
            _accumulate(mask_tail=False)

        @pl.when(k == nk - 1)
        def _tail():
            _accumulate(mask_tail=True)
    else:
        _accumulate(mask_tail=False)

    @pl.when(k == nk - 1)
    def _finalize():
        w1 = w1_ref[...].astype(jnp.float32)
        w2 = w2_ref[...].astype(jnp.float32)
        tb = sum_ref.shape[0]

        avg = sum_ref[...] * inv_hw                              # one multiply total
        stacked = jnp.concatenate([avg, max_ref[...]], axis=0)   # (2*TB, C)
        h = jnp.maximum(jnp.dot(stacked, w1, preferred_element_type=jnp.float32), 0.0)
        s = jax.nn.sigmoid(jnp.dot(h, w2, preferred_element_type=jnp.float32))
        o_ref[...] = (s[:tb] + s[tb:]).astype(o_ref.dtype)


# ----------------------------------------------------------------------------
# Wrapper
# ----------------------------------------------------------------------------
def channel_attention(x_nchw, w1, w2, *,
                      tile_hw=None,
                      force_tiled=False,
                      small_bytes_threshold=None,
                      target_tile_bytes=None,
                      vmem_limit_bytes=None,
                      input_buffer_count=None):
    """x_nchw: (B, C, H, W) any float dtype; w1: (C, C//r); w2: (C//r, C).

    Returns the (B, C) channel-attention weights in float32 (matching the f32
    PyTorch module), accumulating in f32 regardless of input dtype.
    """
    B, C, H, W = x_nchw.shape
    HW = H * W
    Ch = w1.shape[1]
    x_flat = x_nchw.reshape(B, C, HW)
    itemsize = x_flat.dtype.itemsize
    x_bytes = B * C * HW * itemsize
    out_dtype = jnp.float32

    auto_vmem, auto_tile = _vmem_budget()
    if vmem_limit_bytes is None:
        vmem_limit_bytes = auto_vmem
    if target_tile_bytes is None:
        target_tile_bytes = auto_tile
    if small_bytes_threshold is None:
        small_bytes_threshold = target_tile_bytes

    cost = pl.CostEstimate(
        flops=2 * B * C * HW + 8 * B * C * Ch,        # reduce + one stacked tiny MLP
        transcendentals=2 * B * C,                    # sigmoids
        bytes_accessed=x_bytes + (w1.size + w2.size + B * C) * 4,
    )

    use_tiled = force_tiled or (x_bytes > small_bytes_threshold)

    if not use_tiled:
        # Tiny activation: single block, no per-step grid overhead.
        return pl.pallas_call(
            _ca_small_kernel,
            out_shape=jax.ShapeDtypeStruct((B, C), out_dtype),
            grid_spec=pltpu.PrefetchScalarGridSpec(
                num_scalar_prefetch=0,
                grid=(1,),
                in_specs=[
                    pl.BlockSpec((B, C, HW), lambda i: (0, 0, 0)),
                    pl.BlockSpec((C, Ch), lambda i: (0, 0)),
                    pl.BlockSpec((Ch, C), lambda i: (0, 0)),
                ],
                out_specs=pl.BlockSpec((B, C), lambda i: (0, 0)),
            ),
            compiler_params=pltpu.CompilerParams(
                dimension_semantics=("arbitrary",),
                vmem_limit_bytes=vmem_limit_bytes),
            cost_estimate=cost,
        )(x_flat, w1, w2)

    # ---- batch tiling FIRST, so the auto tile size is based on the real block ----
    TB = _choose_batch_tile(B)
    grid_b = B // TB

    # ---- HW (reduction) tiling ----
    if tile_hw is None:
        per_lane_bytes = max(1, TB * C * itemsize)
        tile_hw = (target_tile_bytes // per_lane_bytes) // 128 * 128
    tile_hw = max(512, int(tile_hw))       # >= 512 lanes -> >= 1-2 KiB per DMA row
    if tile_hw >= HW:
        tile_hw = HW                       # single HW step, no ragged tail
    else:
        tile_hw = (tile_hw // 128) * 128   # keep the lane dim 128-aligned
    grid_k = pl.cdiv(HW, tile_hw)

    kernel = functools.partial(
        _ca_tiled_kernel, hw_total=HW, tile_hw=tile_hw, inv_hw=1.0 / HW)

    x_spec_kwargs = {}
    if input_buffer_count is not None and input_buffer_count != 2:
        # v7x option: deeper buffering hides DMA issue/teardown gaps at ~1-2 us steps.
        x_spec_kwargs["pipeline_mode"] = pl.Buffered(int(input_buffer_count))
    x_spec = pl.BlockSpec((TB, C, tile_hw), lambda b, k: (b, 0, k), **x_spec_kwargs)

    return pl.pallas_call(
        kernel,
        out_shape=jax.ShapeDtypeStruct((B, C), out_dtype),
        grid_spec=pltpu.PrefetchScalarGridSpec(
            num_scalar_prefetch=0,
            grid=(grid_b, grid_k),
            in_specs=[
                x_spec,
                pl.BlockSpec((C, Ch), lambda b, k: (0, 0)),   # weights stay resident
                pl.BlockSpec((Ch, C), lambda b, k: (0, 0)),
            ],
            out_specs=pl.BlockSpec((TB, C), lambda b, k: (b, 0)),
            scratch_shapes=[pltpu.VMEM((TB, C), jnp.float32),   # running sum
                            pltpu.VMEM((TB, C), jnp.float32)],  # running max
        ),
        compiler_params=pltpu.CompilerParams(
            dimension_semantics=("parallel", "arbitrary"),
            vmem_limit_bytes=vmem_limit_bytes),
        cost_estimate=cost,
    )(x_flat, w1, w2)


def reference(x_nchw, w1, w2):
    xf = x_nchw.astype(jnp.float32)
    avg = jnp.mean(xf, axis=(2, 3))
    mx = jnp.max(xf, axis=(2, 3))

    def mlp(v):
        return jax.nn.sigmoid(jnp.maximum(v @ w1, 0.0) @ w2)

    return mlp(avg) + mlp(mx)


if __name__ == "__main__":
    key = jax.random.PRNGKey(0)
    kx1, k1, k2, kx2, kx3 = jax.random.split(key, 5)

    C = 32
    reduction = 16
    Ch = C // reduction  # hidden width = 2

    # Deterministic "Linear" weights (stored transposed for right-multiply).
    w1 = jax.random.normal(k1, (C, Ch), dtype=jnp.float32) * 0.1
    w2 = jax.random.normal(k2, (Ch, C), dtype=jnp.float32) * 0.1

    # Case 1: small fast path (single block), f32.
    B1, H1, Wd1 = 2, 16, 16
    x1 = jax.random.normal(kx1, (B1, C, H1, Wd1), dtype=jnp.float32)
    out1 = jax.block_until_ready(channel_attention(x1, w1, w2))
    ref1 = reference(x1, w1, w2)
    assert out1.shape == (B1, C)
    assert jnp.allclose(out1, ref1, atol=1e-5, rtol=1e-5)

    # Case 2: streamed path, bf16, ragged last HW tile (HW=1600, tile_hw=512 -> 4
    # HW steps, only the last one masked).
    B2, H2, Wd2 = 2, 40, 40
    x2 = jax.random.normal(kx2, (B2, C, H2, Wd2), dtype=jnp.float32).astype(jnp.bfloat16)
    out2 = jax.block_until_ready(
        channel_attention(x2, w1, w2, tile_hw=512, force_tiled=True))
    ref2 = reference(x2, w1, w2)
    assert out2.shape == (B2, C)
    assert jnp.allclose(out2, ref2, atol=1e-4, rtol=1e-4)

    # Case 3: streamed path with a split batch axis (B=16 -> TB=8, grid_b=2 so both
    # v7x TensorCores get a "parallel" block), f32, ragged tail (HW=576, tile_hw=512).
    B3, H3, Wd3 = 16, 24, 24
    x3 = jax.random.normal(kx3, (B3, C, H3, Wd3), dtype=jnp.float32)
    out3 = jax.block_until_ready(
        channel_attention(x3, w1, w2, tile_hw=512, force_tiled=True))
    ref3 = reference(x3, w1, w2)
    assert out3.shape == (B3, C)
    assert jnp.allclose(out3, ref3, atol=1e-5, rtol=1e-5)

    print("KERNEL_OK")
</pallas_src>

<mosaic_0001>
module attributes {stable_mosaic.version = 11 : i64} {
  func.func @_ca_small_kernel(%arg0: i32, %arg1: memref<2x32x256xf32, #tpu.memory_space<vmem>>, %arg2: memref<32x2xf32, #tpu.memory_space<vmem>>, %arg3: memref<2x32xf32, #tpu.memory_space<vmem>>, %arg4: memref<2x32xf32, #tpu.memory_space<vmem>>) attributes {dimension_semantics = [#tpu.dimension_semantics<arbitrary>], iteration_bounds = array<i64: 1>, scalar_prefetch = 0 : i64, scratch_operands = 0 : i64, tpu.core_type = #tpu.core_type<tc>, window_params = [{pipeline_mode = #tpu.pipeline_mode<synchronous>, transform_indices = @transform_0, window_bounds = array<i64: 2, 32, 256>}, {pipeline_mode = #tpu.pipeline_mode<synchronous>, transform_indices = @transform_1, window_bounds = array<i64: 32, 2>}, {pipeline_mode = #tpu.pipeline_mode<synchronous>, transform_indices = @transform_2, window_bounds = array<i64: 2, 32>}, {pipeline_mode = #tpu.pipeline_mode<synchronous>, transform_indices = @transform_3, window_bounds = array<i64: 2, 32>}]} {
    %c0 = arith.constant 0 : index
    %c0_0 = arith.constant 0 : index
    %c0_1 = arith.constant 0 : index
    %0 = vector.load %arg1[%c0, %c0_0, %c0_1] : memref<2x32x256xf32, #tpu.memory_space<vmem>>, vector<2x32x256xf32>
    %cst = arith.constant dense<0.000000e+00> : vector<2x32xf32>
    %1 = vector.multi_reduction <add>, %0, %cst [2] : vector<2x32x256xf32> to vector<2x32xf32>
    %cst_2 = arith.constant 3.906250e-03 : f32
    %2 = vector.broadcast %cst_2 : f32 to vector<2x32xf32>
    %3 = arith.mulf %1, %2 : vector<2x32xf32>
    %cst_3 = arith.constant dense<0xFF800000> : vector<2x32xf32>
    %4 = vector.multi_reduction <maximumf>, %0, %cst_3 [2] : vector<2x32x256xf32> to vector<2x32xf32>
    %c0_4 = arith.constant 0 : index
    %c0_5 = arith.constant 0 : index
    %5 = vector.load %arg2[%c0_4, %c0_5] : memref<32x2xf32, #tpu.memory_space<vmem>>, vector<32x2xf32>
    %c0_6 = arith.constant 0 : index
    %c0_7 = arith.constant 0 : index
    %6 = vector.load %arg3[%c0_6, %c0_7] : memref<2x32xf32, #tpu.memory_space<vmem>>, vector<2x32xf32>
    %7 = tpu.concatenate %3, %4 in 0 : vector<2x32xf32>, vector<2x32xf32> -> vector<4x32xf32>
    %cst_8 = arith.constant dense<0.000000e+00> : vector<4x2xf32>
    %8 = tpu.matmul %7, %5, %cst_8 {dimension_numbers = #tpu.dot_dimension_numbers<[1], [0], [0], [1], [0, 0, 1, 1], [], []>} : vector<4x32xf32>, vector<32x2xf32>, vector<4x2xf32> -> vector<4x2xf32>
    %cst_9 = arith.constant 0.000000e+00 : f32
    %9 = vector.broadcast %cst_9 : f32 to vector<4x2xf32>
    %10 = arith.maximumf %8, %9 : vector<4x2xf32>
    %cst_10 = arith.constant dense<0.000000e+00> : vector<4x32xf32>
    %11 = tpu.matmul %10, %6, %cst_10 {dimension_numbers = #tpu.dot_dimension_numbers<[1], [0], [0], [1], [0, 0, 1, 1], [], []>} : vector<4x2xf32>, vector<2x32xf32>, vector<4x32xf32> -> vector<4x32xf32>
    %12 = arith.negf %11 : vector<4x32xf32>
    %13 = math.exp %12 : vector<4x32xf32>
    %cst_11 = arith.constant 1.000000e+00 : f32
    %14 = vector.broadcast %cst_11 : f32 to vector<4x32xf32>
    %15 = arith.addf %14, %13 : vector<4x32xf32>
    %16 = arith.divf %14, %15 : vector<4x32xf32>
    %17 = vector.extract_strided_slice %16 {offsets = [0, 0], sizes = [2, 32], strides = [1, 1]} : vector<4x32xf32> to vector<2x32xf32>
    %18 = vector.extract_strided_slice %16 {offsets = [2, 0], sizes = [2, 32], strides = [1, 1]} : vector<4x32xf32> to vector<2x32xf32>
    %19 = arith.addf %17, %18 : vector<2x32xf32>
    %c0_12 = arith.constant 0 : index
    %c0_13 = arith.constant 0 : index
    %20 = vector.load %arg4[%c0_12, %c0_13] : memref<2x32xf32, #tpu.memory_space<vmem>>, vector<2x32xf32>
    tpu.vector_store %arg4[%c0_12, %c0_13], %19 {strides = array<i32>} : memref<2x32xf32, #tpu.memory_space<vmem>>, vector<2x32xf32>,
    return
  }
  func.func @transform_0(%arg0: i32) -> (i32, i32, i32) {
    %c0_i32 = arith.constant 0 : i32
    %c0_i32_0 = arith.constant 0 : i32
    %c0_i32_1 = arith.constant 0 : i32
    %c0_i32_2 = arith.constant 0 : i32
    return %c0_i32, %c0_i32_0, %c0_i32_1 : i32, i32, i32
  }
  func.func @transform_1(%arg0: i32) -> (i32, i32) {
    %c0_i32 = arith.constant 0 : i32
    %c0_i32_0 = arith.constant 0 : i32
    %c0_i32_1 = arith.constant 0 : i32
    return %c0_i32, %c0_i32_0 : i32, i32
  }
  func.func @transform_2(%arg0: i32) -> (i32, i32) {
    %c0_i32 = arith.constant 0 : i32
    %c0_i32_0 = arith.constant 0 : i32
    %c0_i32_1 = arith.constant 0 : i32
    return %c0_i32, %c0_i32_0 : i32, i32
  }
  func.func @transform_3(%arg0: i32) -> (i32, i32) {
    %c0_i32 = arith.constant 0 : i32
    %c0_i32_0 = arith.constant 0 : i32
    %c0_i32_1 = arith.constant 0 : i32
    return %c0_i32, %c0_i32_0 : i32, i32
  }
}

</mosaic_0001>

<llo_original>
// kernel: tpu_custom_call.1
$region0: #{tpu_custom_call.1}
  #allocation0 [shape = 'u32[]', space=smem, size = 0x4, offset = 0x4, fixed_abs, tag = 'smem constant byte address 0x4 - core index']
  #allocation1 [shape = 'u32[72,128]{1,0:T(1,128)}', space=vmem, size = 0x9000, scoped, tag = 'internal scratch']
  %s0 = inlined_call_operand.hbm [shape: f32[2,32,256], index: 0, kind: input, shape index: {}]
  %s1 = inlined_call_operand.vmem [shape: f32[32,2], index: 1, kind: input, shape index: {}]
  %s2 = inlined_call_operand.vmem [shape: f32[2,32], index: 2, kind: input, shape index: {}]
  %s3 = inlined_call_operand.hbm [shape: f32[2,32], index: 3, kind: output, shape index: {}]
  %s4 = sld [smem:[#allocation0]]
  $region26: #{tpu_custom_call.1} parent=0
    _
  %s6 = ssub.s32 1, %s4
  %s7 = scalar_select 0, %s6, %s4
  $region1: #{tpu_custom_call.1} parent=0
    #allocation2 [shape = 'u8[65536]{0}', space=vmem, size = 0x10000, scoped, tag = 'input window, operand 0, single buffered']
    #allocation3 [shape = 's32[1]{0}', space=sflag, size = 0x4, scoped, tag = 'scoped memory for tpu_custom_call.1']
    #allocation4 [shape = 's32[1]{0}', space=sflag, size = 0x4, scoped, tag = 'scoped memory for tpu_custom_call.1']
    #allocation5 [shape = 'u8[1024]{0}', space=vmem, size = 0x400, scoped, tag = 'output window, operand 0, single buffered']
    %8 = vsyncpa [#allocation3], 0
    %9 = vsyncpa [#allocation4], 0
    // Predicated region
    $region2: #{tpu_custom_call.1} parent=1 // pred_check
      _
    $region3: #{tpu_custom_call.1} parent=1 // pred_check_branch
      %11 = sbr.rel (0) target = $region5
    $region4: #{tpu_custom_call.1} parent=1 // pred_region
      %13 = vsyncadd [#allocation3], 0
      %s14 = sshll.u32 %s0, 4
      %s15 = int_to_ptr.hbm [resolvable:$true] %s14
      %s16 = sshll.u32 [#allocation2], 4
      %s17 = int_to_ptr.vmem [resolvable:$true] %s16
      %22 = dma.hbm_to_vmem [thread:$0]  %s15, 2048, %s17, [#allocation3], 256, 256, 16
    $region5: #{tpu_custom_call.1} parent=1 // pred_fallthru
      _
    // Predicated region
    $region6: #{tpu_custom_call.1} parent=1 // pred_check
      _
    $region7: #{tpu_custom_call.1} parent=1 // pred_check_branch
      %24 = sbr.rel (0) target = $region9
    $region8: #{tpu_custom_call.1} parent=1 // pred_region
      _
    $region9: #{tpu_custom_call.1} parent=1 // pred_fallthru
      _
    // Predicated region
    $region10: #{tpu_custom_call.1} parent=1 // pred_check
      _
    $region11: #{tpu_custom_call.1} parent=1 // pred_check_branch
      %26 = sbr.rel (0) target = $region13
    $region12: #{tpu_custom_call.1} parent=1 // pred_region
      _
    $region13: #{tpu_custom_call.1} parent=1 // pred_fallthru
      _
    // Predicated region
    $region14: #{tpu_custom_call.1} parent=1 // pred_check
      _
    $region15: #{tpu_custom_call.1} parent=1 // pred_check_branch
      %28 = sbr.rel (0) target = $region17
    $region16: #{tpu_custom_call.1} parent=1 // pred_region
      %30 = dma.done [#allocation3], 2048
    $region17: #{tpu_custom_call.1} parent=1 // pred_fallthru
      _
    %v31 = vld [vmem:[#allocation2] sm:$0xff]
    %v32 = vld [vmem:[#allocation2 + $0x8] sm:$0xff]
    %v33 = vld [vmem:[#allocation2 + $0x10] sm:$0xff]
    %v34 = vld [vmem:[#allocation2 + $0x18] sm:$0xff]
    %v35 = vld [vmem:[#allocation2 + $0x20] sm:$0xff]
    %v36 = vld [vmem:[#allocation2 + $0x28] sm:$0xff]
    %v37 = vld [vmem:[#allocation2 + $0x30] sm:$0xff]
    %v38 = vld [vmem:[#allocation2 + $0x38] sm:$0xff]
    %v39 = vld [vmem:[#allocation2 + $0x40] sm:$0xff]
    %v40 = vld [vmem:[#allocation2 + $0x48] sm:$0xff]
    %v41 = vld [vmem:[#allocation2 + $0x50] sm:$0xff]
    %v42 = vld [vmem:[#allocation2 + $0x58] sm:$0xff]
    %v43 = vld [vmem:[#allocation2 + $0x60] sm:$0xff]
    %v44 = vld [vmem:[#allocation2 + $0x68] sm:$0xff]
    %v45 = vld [vmem:[#allocation2 + $0x70] sm:$0xff]
    %v46 = vld [vmem:[#allocation2 + $0x78] sm:$0xff]
    %v47 = vadd.f32 %v31, %v32
    %48 = vadd.xlane.f32.xlu0 %v47
    %v49 = vpop.xlane.xlu0 %48
    %v50 = vadd.f32 %v33, %v34
    %51 = vadd.xlane.f32.xlu0 %v50
    %v52 = vpop.xlane.xlu0 %51
    %v53 = vadd.f32 %v35, %v36
    %54 = vadd.xlane.f32.xlu0 %v53
    %v55 = vpop.xlane.xlu0 %54
    %v56 = vadd.f32 %v37, %v38
    %57 = vadd.xlane.f32.xlu0 %v56
    %v58 = vpop.xlane.xlu0 %57
    %v59 = vadd.f32 %v39, %v40
    %60 = vadd.xlane.f32.xlu0 %v59
    %v61 = vpop.xlane.xlu0 %60
    %v62 = vadd.f32 %v41, %v42
    %63 = vadd.xlane.f32.xlu0 %v62
    %v64 = vpop.xlane.xlu0 %63
    %v65 = vadd.f32 %v43, %v44
    %66 = vadd.xlane.f32.xlu0 %v65
    %v67 = vpop.xlane.xlu0 %66
    %v68 = vadd.f32 %v45, %v46
    %69 = vadd.xlane.f32.xlu0 %v68
    %v70 = vpop.xlane.xlu0 %69
    %v71 = vmul.f32 %v49, 0.00390625
    %v72 = vmul.f32 %v52, 0.00390625
    %v73 = vmul.f32 %v55, 0.00390625
    %v74 = vmul.f32 %v58, 0.00390625
    %v75 = vmul.f32 %v61, 0.00390625
    %v76 = vmul.f32 %v64, 0.00390625
    %v77 = vmul.f32 %v67, 0.00390625
    %v78 = vmul.f32 %v70, 0.00390625
    %v79 = vmax.f32 %v31, %v32
    %80 = vmax.xlane.f32.xlu0 %v79
    %v81 = vpop.xlane.xlu0 %80
    %v82 = vmax.f32 %v33, %v34
    %83 = vmax.xlane.f32.xlu0 %v82
    %v84 = vpop.xlane.xlu0 %83
    %v85 = vmax.f32 %v35, %v36
    %86 = vmax.xlane.f32.xlu0 %v85
    %v87 = vpop.xlane.xlu0 %86
    %v88 = vmax.f32 %v37, %v38
    %89 = vmax.xlane.f32.xlu0 %v88
    %v90 = vpop.xlane.xlu0 %89
    %v91 = vmax.f32 %v39, %v40
    %92 = vmax.xlane.f32.xlu0 %v91
    %v93 = vpop.xlane.xlu0 %92
    %v94 = vmax.f32 %v41, %v42
    %95 = vmax.xlane.f32.xlu0 %v94
    %v96 = vpop.xlane.xlu0 %95
    %v97 = vmax.f32 %v43, %v44
    %98 = vmax.xlane.f32.xlu0 %v97
    %v99 = vpop.xlane.xlu0 %98
    %v100 = vmax.f32 %v45, %v46
    %101 = vmax.xlane.f32.xlu0 %v100
    %v102 = vpop.xlane.xlu0 %101
    %v103 = vld [vmem:[%s1] sm:$0xff]
    %v104 = vld [vmem:[%s1 + $0x8] sm:$0xff]
    %v105 = vld [vmem:[%s1 + $0x10] sm:$0xff]
    %v106 = vld [vmem:[%s1 + $0x18] sm:$0xff]
    %v107 = vld [vmem:[%s2] sm:$0x3]
    %v116 = vlaneseq
    %v117 = vand.u32 %v116, 127
    %v118 = vperm.slane %v71, %v117
    %v119 = vadd.s32 %v117, 4294967288
    %v120 = vperm.slane %v72, %v119
    %vm121 = vcmask 130112
    %v122 = vsel %vm121, %v120, %v118
    %v123 = vadd.s32 %v117, 4294967280
    %v124 = vperm.slane %v73, %v123
    %vm125 = vcmask 195712
    %v126 = vsel %vm125, %v124, %v122
    %v127 = vadd.s32 %v117, 4294967272
    %v128 = vperm.slane %v74, %v127
    %vm129 = vcmask 261312
    %v130 = vsel %vm129, %v128, %v126
    %v131 = vperm.slane %v75, %v117
    %v132 = vperm.slane %v76, %v119
    %v133 = vsel %vm121, %v132, %v131
    %v134 = vperm.slane %v77, %v123
    %v135 = vsel %vm125, %v134, %v133
    %v136 = vperm.slane %v78, %v127
    %v137 = vsel %vm129, %v136, %v135
    %vm138 = vcmask 1041409
    %v139 = vsel %vm138, %v137, %v130
    %v149 = vperm.slane %v81, %v117
    %v150 = vperm.slane %v84, %v119
    %v151 = vsel %vm121, %v150, %v149
    %v152 = vperm.slane %v87, %v123
    %v153 = vsel %vm125, %v152, %v151
    %v154 = vperm.slane %v90, %v127
    %v155 = vsel %vm129, %v154, %v153
    %v156 = vperm.slane %v93, %v117
    %v157 = vperm.slane %v96, %v119
    %v158 = vsel %vm121, %v157, %v156
    %v159 = vperm.slane %v99, %v123
    %v160 = vsel %vm125, %v159, %v158
    %v161 = vperm.slane %v102, %v127
    %v162 = vsel %vm129, %v161, %v160
    %vm163 = vcmask 1043459
    %v164 = vsel %vm163, %v162, %v155
    %vm166 = vcmask 1041408
    %v167 = vsel %vm166, %v139, %v164
    %vm168 = vcmask 261120
    %v170 = vsel %vm168, %v167, 0
    %172 = vmatpush.msra.mxu0 0.0
    %173 = vmatpush.msra.mxu0 0.0
    %174 = vmatpush.msra.mxu0 0.0
    %175 = vmatpush.msra.mxu0 0.0
    %176 = vmatpush.msra.mxu0 0.0
    %177 = vmatpush.msra.mxu0 0.0
    %178 = vmatpush.msra.mxu0 0.0
    %179 = vmatpush.msra.mxu0 0.0
    %180 = vmatpush.msra.mxu0 0.0
    %181 = vmatpush.msra.mxu0 0.0
    %182 = vmatpush.msra.mxu0 0.0
    %183 = vmatpush.msra.mxu0 0.0
    %184 = vmatpush.msra.mxu0 %v106
    %185 = vmatpush.msra.mxu0 %v105
    %186 = vmatpush.msra.mxu0 %v104
    %187 = vmatpush.msra.mxu0 %v103
    %188 = vmatmul.f32.gmra.mxu0 %v170
    %v189 = vpop.f32.mrf.mxu0
    %v190 = vadd.f32 0.0, %v189
    %191 = vdwg.mxu0
    %v192 = vmax.f32 %v190, 0.0
    %vm193 = vcmask 15360
    %v195 = vsel %vm193, %v192, 0
    %v198 = vsel %vm166, %v107, 0
    %200 = vmatpush.msra.mxu0 0.0
    %201 = vmatpush.msra.mxu0 0.0
    %202 = vmatpush.msra.mxu0 0.0
    %203 = vmatpush.msra.mxu0 0.0
    %204 = vmatpush.msra.mxu0 0.0
    %205 = vmatpush.msra.mxu0 0.0
    %206 = vmatpush.msra.mxu0 0.0
    %207 = vmatpush.msra.mxu0 0.0
    %208 = vmatpush.msra.mxu0 0.0
    %209 = vmatpush.msra.mxu0 0.0
    %210 = vmatpush.msra.mxu0 0.0
    %211 = vmatpush.msra.mxu0 0.0
    %212 = vmatpush.msra.mxu0 0.0
    %213 = vmatpush.msra.mxu0 0.0
    %214 = vmatpush.msra.mxu0 0.0
    %215 = vmatpush.msra.mxu0 %v198
    %216 = vmatmul.f32.gmra.mxu0 %v195
    %v217 = vpop.f32.mrf.mxu0
    %v218 = vadd.f32 0.0, %v217
    %219 = vdwg.mxu0
    %v220 = vxor.u32 %v218, 2147483648
    %v221 = vmul.f32 %v220, 1.442695
    %v222 = vpow.pop %v221
    %v223 = vadd.f32 %v222, 1.0
    %v224 = vrcp.pop %v223
    %v225 = vmul.f32 %v223, %v224
    %v226 = vsub.f32 1.0, %v225
    %v227 = vmul.f32 %v224, %v226
    %v228 = vadd.f32 %v224, %v227
    %vm229 = vweird.f32 %v223
    %vm230 = vweird.f32 %v224
    %vm231 = vmor %vm229, %vm230
    %v232 = vsel %vm231, %v224, %v228
    %v233 = vand.u32 2147483647, %v223
    %vm234 = vcmp.eq.f32.partialorder %v233, 8.507059e+37
    %v235 = vand.u32 %v223, 2147483648
    %v236 = vor.u32 1.1754944e-38, %v235
    %v237 = vsel %vm234, %v236, %v232
    %v238 = vmul.f32 1.0, %v237
    %v240 = vrot.slane %v238, 2
    %v242 = vadd.f32 %v238, %v240
    %vm243 = vcmask 254976
    %244 = vst.msk [vmem:[#allocation5] sm:$0x3] %vm243, %v242
    // Predicated region
    $region18: #{tpu_custom_call.1} parent=1 // pred_check
      _
    $region19: #{tpu_custom_call.1} parent=1 // pred_check_branch
      %246 = sbr.rel (0) target = $region21
    $region20: #{tpu_custom_call.1} parent=1 // pred_region
      %248 = vsyncadd [#allocation4], 0
      %s250 = sshll.u32 [#allocation5], 4
      %s251 = int_to_ptr.vmem [resolvable:$true] %s250
      %s252 = sshll.u32 %s3, 4
      %s253 = int_to_ptr.hbm [resolvable:$true] %s252
      %255 = dma.vmem_to_hbm [thread:$0]  %s251, 32, %s253, [#allocation4]
    $region21: #{tpu_custom_call.1} parent=1 // pred_fallthru
      _
    // Predicated region
    $region22: #{tpu_custom_call.1} parent=1 // pred_check
      _
    $region23: #{tpu_custom_call.1} parent=1 // pred_check_branch
      %257 = sbr.rel (0) target = $region25
    $region24: #{tpu_custom_call.1} parent=1 // pred_region
      %259 = dma.done [#allocation4], 32
    $region25: #{tpu_custom_call.1} parent=1 // pred_fallthru
      _
    %260 = vsyncpa [#allocation3], 1
    %261 = vsyncpa [#allocation4], 1

</llo_original>
